<compile_context>
chip_gen: v5e
topology: v5e:2x2
jax: 0.10.0
libtpu: 0.0.40
codegen_flags: <defaults>
</compile_context>

<pallas_src>
import jax
import jax.numpy as jnp
from jax import lax
from jax.experimental import pallas as pl
from jax.experimental.pallas import tpu as pltpu


def _round_up(x, m):
    return (x + m - 1) // m * m


def _pad2(x, rows, cols, dtype):
    x = x.astype(dtype)
    return jnp.pad(x, ((0, rows - x.shape[0]), (0, cols - x.shape[1])))


def _vmem_limit(working_set_bytes):
    # 2x headroom over the double-buffered footprint, clamped to [4, 32] MiB
    # so the plan stays valid on v7x's 64 MiB physical VMEM.
    return int(min(32 << 20, max(4 << 20, 2 * working_set_bytes)))


def _row_tile(n, cap=256, sub=16):
    t = min(cap, _round_up(n, sub))
    # v7x megacore: prefer >=2 tiles along the parallel row axis when n allows
    # so both TensorCores get work (no-op on 1-TC v5e/v6e).
    if t >= 2 * sub and _round_up(n, t) // t < 2:
        t = _round_up(t // 2, sub)
    return t


# ----------------------------------------------------------------------------
# Kernel 1: K-tiled projection F = X @ W with fused L2 normalization.
#   bf16 MXU operands, f32 VMEM accumulator, normalized bf16 output.
#   The feature dim D is kept whole per tile so the row norm is exact.
# ----------------------------------------------------------------------------
def _project_norm_kernel(x_ref, w_ref, f_ref, acc_ref):
    k = pl.program_id(1)

    @pl.when(k == 0)
    def _():
        acc_ref[...] = jnp.zeros_like(acc_ref)

    acc_ref[...] += jnp.dot(x_ref[...], w_ref[...],
                            preferred_element_type=jnp.float32)

    @pl.when(k == pl.num_programs(1) - 1)
    def _():
        acc = acc_ref[...]                                      # (tm, D) f32
        inv = lax.rsqrt(jnp.sum(acc * acc, axis=-1, keepdims=True) + 1e-12)
        f_ref[...] = (acc * inv).astype(jnp.bfloat16)           # normalized bf16


def project_normalize_pallas(x_bf16, w_bf16, *, tm, tk):
    M, K = x_bf16.shape
    Kw, D = w_bf16.shape
    assert K == Kw and M % tm == 0 and K % tk == 0 and D % 128 == 0

    footprint = (tm * tk * 2 * 2      # x tile, double buffered
                 + tk * D * 2 * 2     # w tile, double buffered
                 + tm * D * 2 * 2     # bf16 output tile, double buffered
                 + tm * D * 4)        # f32 accumulator scratch

    return pl.pallas_call(
        _project_norm_kernel,
        out_shape=jax.ShapeDtypeStruct((M, D), jnp.bfloat16),
        grid_spec=pltpu.PrefetchScalarGridSpec(
            num_scalar_prefetch=0,
            grid=(M // tm, K // tk),
            in_specs=[
                pl.BlockSpec((tm, tk), lambda i, k: (i, k)),
                pl.BlockSpec((tk, D), lambda i, k: (k, 0)),
            ],
            out_specs=pl.BlockSpec((tm, D), lambda i, k: (i, 0)),
            scratch_shapes=[pltpu.VMEM((tm, D), jnp.float32)],
        ),
        compiler_params=pltpu.CompilerParams(
            dimension_semantics=("parallel", "arbitrary"),
            vmem_limit_bytes=_vmem_limit(footprint),
        ),
    )(x_bf16, w_bf16)


# ----------------------------------------------------------------------------
# Kernel 2: cosine similarity + loss = 1 - sim on pre-normalized bf16 features.
#   Contract the last (D) dim of BOTH operands (flash-attn style A @ B^T):
#   lane-dense, no materialized txt.T relayout.
# ----------------------------------------------------------------------------
def _sim_loss_kernel(imgn_ref, txtn_ref, loss_ref):
    sim = lax.dot_general(
        imgn_ref[...], txtn_ref[...],
        dimension_numbers=(((1,), (1,)), ((), ())),
        preferred_element_type=jnp.float32)                     # (tb, tt) f32
    loss_ref[...] = 1.0 - sim


# ----------------------------------------------------------------------------
# Wrapper
# ----------------------------------------------------------------------------
def prepare_clip_weights(w_img, w_txt):
    """Pad + cast projection weights to bf16 ONCE (hoisted out of per-call path)."""
    K, D = w_img.shape
    E, D2 = w_txt.shape
    assert D == D2
    Dp = _round_up(D, 128)
    tk_i = min(2048, _round_up(K, 128))
    tk_t = min(2048, _round_up(E, 128))
    Kp = _round_up(K, tk_i)
    Ep = _round_up(E, tk_t)
    return dict(
        wimg=_pad2(w_img, Kp, Dp, jnp.bfloat16),
        wtxt=_pad2(w_txt, Ep, Dp, jnp.bfloat16),
        K=K, E=E, D=D, Dp=Dp, Kp=Kp, Ep=Ep, tk_i=tk_i, tk_t=tk_t,
    )


def clip_sim_loss_pallas(img_flat, txt_pooled, weights):
    B, K = img_flat.shape
    T, E = txt_pooled.shape
    assert K == weights["K"] and E == weights["E"]
    Dp = weights["Dp"]

    tb = _row_tile(B)
    tt = _row_tile(T)
    Bp = _round_up(B, tb)
    Tp = _round_up(T, tt)

    img_p = _pad2(img_flat, Bp, weights["Kp"], jnp.bfloat16)
    txt_p = _pad2(txt_pooled, Tp, weights["Ep"], jnp.bfloat16)

    # Stage 1: "encoders" (projections) + fused L2 norm -> normalized bf16 features.
    img_n = project_normalize_pallas(img_p, weights["wimg"],
                                     tm=tb, tk=weights["tk_i"])   # (Bp, Dp) bf16
    txt_n = project_normalize_pallas(txt_p, weights["wtxt"],
                                     tm=tt, tk=weights["tk_t"])   # (Tp, Dp) bf16

    # Stage 2: similarity + loss. Keep the whole text feature block resident
    # in VMEM when it is small (common few-prompt case): its block index is
    # then constant across the B axis, so it is DMA'd exactly once.
    tt_sim = Tp if Tp * Dp * 2 <= (8 << 20) else tt

    footprint = (tb * Dp * 2 * 2          # image tile, double buffered
                 + tt_sim * Dp * 2 * 2    # text tile, double buffered
                 + tb * tt_sim * 4 * 2)   # output tile, double buffered

    loss_p = pl.pallas_call(
        _sim_loss_kernel,
        out_shape=jax.ShapeDtypeStruct((Bp, Tp), jnp.float32),
        grid_spec=pltpu.PrefetchScalarGridSpec(
            num_scalar_prefetch=0,
            grid=(Bp // tb, Tp // tt_sim),
            in_specs=[
                pl.BlockSpec((tb, Dp), lambda i, j: (i, 0)),
                pl.BlockSpec((tt_sim, Dp), lambda i, j: (j, 0)),
            ],
            out_specs=pl.BlockSpec((tb, tt_sim), lambda i, j: (i, j)),
        ),
        compiler_params=pltpu.CompilerParams(
            dimension_semantics=("parallel", "parallel"),
            vmem_limit_bytes=_vmem_limit(footprint),
        ),
    )(img_n, txt_n)

    return loss_p[:B, :T]


# ----------------------------------------------------------------------------
# Glue: deterministic "preprocess", "tokenize"/embed, parameter initialization
# ----------------------------------------------------------------------------
def preprocess(image_nchw):
    # TODO(synk): real CLIP preprocess is a PIL resize/center-crop to 224x224;
    # only the per-channel normalization is kept here.
    c = image_nchw.shape[1]
    mean = jnp.array([0.481, 0.458, 0.408, 0.45], jnp.float32)[:c].reshape(1, -1, 1, 1)
    std = jnp.array([0.269, 0.261, 0.276, 0.27], jnp.float32)[:c].reshape(1, -1, 1, 1)
    return (image_nchw - mean) / std


def embed_tokens(tokens, embed_table):
    # (T, S) int32 -> (T, E) mean-pooled embeddings (stand-in for clip.tokenize
    # + text transformer front-end).
    return jnp.mean(embed_table[tokens], axis=1)


def make_params(key, flat_dim, embed_in, embed_dim, vocab):
    k1, k2, k3 = jax.random.split(key, 3)
    w_img = jax.random.normal(k1, (flat_dim, embed_dim), jnp.float32) * 0.02
    w_txt = jax.random.normal(k2, (embed_in, embed_dim), jnp.float32) * 0.02
    embed_table = jax.random.normal(k3, (vocab, embed_in), jnp.float32) * 0.02
    return w_img, w_txt, embed_table


# ----------------------------------------------------------------------------
# Pure-JAX reference mirroring the kernel pipeline (bf16 MXU, f32 accumulate,
# f32 normalization, bf16 normalized features).
# ----------------------------------------------------------------------------
def clip_loss_ref(img_flat, w_img, txt_pooled, w_txt):
    img_f = jnp.dot(img_flat.astype(jnp.bfloat16), w_img.astype(jnp.bfloat16),
                    preferred_element_type=jnp.float32)
    txt_f = jnp.dot(txt_pooled.astype(jnp.bfloat16), w_txt.astype(jnp.bfloat16),
                    preferred_element_type=jnp.float32)
    img_n = (img_f * lax.rsqrt(jnp.sum(img_f * img_f, -1, keepdims=True) + 1e-12)
             ).astype(jnp.bfloat16)
    txt_n = (txt_f * lax.rsqrt(jnp.sum(txt_f * txt_f, -1, keepdims=True) + 1e-12)
             ).astype(jnp.bfloat16)
    sim = lax.dot_general(img_n, txt_n,
                          dimension_numbers=(((1,), (1,)), ((), ())),
                          preferred_element_type=jnp.float32)
    return 1.0 - sim


if __name__ == "__main__":
    key = jax.random.PRNGKey(0)
    kx, kt, kp = jax.random.split(key, 3)

    # Small shapes: batch=2 images of [4,16,16] (NCHW), 2 prompts of seq=8.
    B, C, H, W = 2, 4, 16, 16
    T, S = 2, 8
    VOCAB, E, D = 64, 32, 32

    image = jax.random.normal(kx, (B, C, H, W), jnp.float32)
    tokens = jax.random.randint(kt, (T, S), 0, VOCAB, jnp.int32)

    w_img, w_txt, embed_table = make_params(kp, C * H * W, E, D, VOCAB)

    # One-time weight preparation (pad + bf16 cast, hoisted out of the call path).
    weights = prepare_clip_weights(w_img, w_txt)
    weights = jax.tree_util.tree_map(
        lambda x: jax.block_until_ready(x) if isinstance(x, jax.Array) else x, weights)

    # Glue: preprocess + flatten (NCHW -> (B, C*H*W)), tokenize/embed text.
    img_flat = preprocess(image).reshape(B, C * H * W)
    txt_pooled = embed_tokens(tokens, embed_table)

    loss = clip_sim_loss_pallas(img_flat, txt_pooled, weights)
    jax.block_until_ready(loss)

    ref = clip_loss_ref(img_flat, w_img, txt_pooled, w_txt)
    assert loss.shape == (B, T)
    assert jnp.allclose(loss, ref, atol=2e-2, rtol=2e-2), (loss, ref)

    print("KERNEL_OK")
</pallas_src>

<mosaic_0001>
module attributes {stable_mosaic.version = 11 : i64} {
  func.func @_project_norm_kernel(%arg0: i32, %arg1: i32, %arg2: memref<16x1024xbf16, #tpu.memory_space<vmem>>, %arg3: memref<1024x128xbf16, #tpu.memory_space<vmem>>, %arg4: memref<16x128xbf16, #tpu.memory_space<vmem>>, %arg5: memref<16x128xf32, #tpu.memory_space<vmem>>) attributes {dimension_semantics = [#tpu.dimension_semantics<parallel>, #tpu.dimension_semantics<arbitrary>], iteration_bounds = array<i64: 1, 1>, scalar_prefetch = 0 : i64, scratch_operands = 1 : i64, tpu.core_type = #tpu.core_type<tc>, window_params = [{transform_indices = @transform_0, window_bounds = array<i64: 16, 1024>}, {transform_indices = @transform_1, window_bounds = array<i64: 1024, 128>}, {transform_indices = @transform_2, window_bounds = array<i64: 16, 128>}]} {
    %c0_i32 = arith.constant 0 : i32
    %0 = arith.cmpi eq, %arg1, %c0_i32 : i32
    %1 = arith.extui %0 : i1 to i32
    %c0_i32_0 = arith.constant 0 : i32
    %2 = arith.cmpi ne, %1, %c0_i32_0 : i32
    scf.if %2 {
      %cst_10 = arith.constant 0.000000e+00 : f32
      %12 = vector.broadcast %cst_10 : f32 to vector<16x128xf32>
      %c0_11 = arith.constant 0 : index
      %c0_12 = arith.constant 0 : index
      %13 = vector.load %arg5[%c0_11, %c0_12] : memref<16x128xf32, #tpu.memory_space<vmem>>, vector<16x128xf32>
      tpu.vector_store %arg5[%c0_11, %c0_12], %12 {strides = array<i32>} : memref<16x128xf32, #tpu.memory_space<vmem>>, vector<16x128xf32>,
    } else {
    }
    %c0 = arith.constant 0 : index
    %c0_1 = arith.constant 0 : index
    %3 = vector.load %arg5[%c0, %c0_1] : memref<16x128xf32, #tpu.memory_space<vmem>>, vector<16x128xf32>
    %c0_2 = arith.constant 0 : index
    %c0_3 = arith.constant 0 : index
    %4 = vector.load %arg2[%c0_2, %c0_3] : memref<16x1024xbf16, #tpu.memory_space<vmem>>, vector<16x1024xbf16>
    %c0_4 = arith.constant 0 : index
    %c0_5 = arith.constant 0 : index
    %5 = vector.load %arg3[%c0_4, %c0_5] : memref<1024x128xbf16, #tpu.memory_space<vmem>>, vector<1024x128xbf16>
    %cst = arith.constant dense<0.000000e+00> : vector<16x128xf32>
    %6 = tpu.matmul %4, %5, %cst {dimension_numbers = #tpu.dot_dimension_numbers<[1], [0], [0], [1], [0, 0, 1, 1], [], []>} : vector<16x1024xbf16>, vector<1024x128xbf16>, vector<16x128xf32> -> vector<16x128xf32>
    %7 = arith.addf %3, %6 : vector<16x128xf32>
    %c0_6 = arith.constant 0 : index
    %c0_7 = arith.constant 0 : index
    %8 = vector.load %arg5[%c0_6, %c0_7] : memref<16x128xf32, #tpu.memory_space<vmem>>, vector<16x128xf32>
    tpu.vector_store %arg5[%c0_6, %c0_7], %7 {strides = array<i32>} : memref<16x128xf32, #tpu.memory_space<vmem>>, vector<16x128xf32>,
    %c0_i32_8 = arith.constant 0 : i32
    %9 = arith.cmpi eq, %arg1, %c0_i32_8 : i32
    %10 = arith.extui %9 : i1 to i32
    %c0_i32_9 = arith.constant 0 : i32
    %11 = arith.cmpi ne, %10, %c0_i32_9 : i32
    scf.if %11 {
      %c0_10 = arith.constant 0 : index
      %c0_11 = arith.constant 0 : index
      %12 = vector.load %arg5[%c0_10, %c0_11] : memref<16x128xf32, #tpu.memory_space<vmem>>, vector<16x128xf32>
      %13 = arith.mulf %12, %12 : vector<16x128xf32>
      %cst_12 = arith.constant dense<0.000000e+00> : vector<16xf32>
      %14 = vector.multi_reduction <add>, %13, %cst_12 [1] : vector<16x128xf32> to vector<16xf32>
      %15 = vector.shape_cast %14 : vector<16xf32> to vector<16x1xf32>
      %cst_13 = arith.constant 9.99999996E-13 : f32
      %16 = vector.broadcast %cst_13 : f32 to vector<16x1xf32>
      %17 = arith.addf %15, %16 : vector<16x1xf32>
      %18 = math.rsqrt %17 : vector<16x1xf32>
      %19 = vector.broadcast %18 : vector<16x1xf32> to vector<16x128xf32>
      %20 = arith.mulf %12, %19 : vector<16x128xf32>
      %21 = arith.truncf %20 : vector<16x128xf32> to vector<16x128xbf16>
      %c0_14 = arith.constant 0 : index
      %c0_15 = arith.constant 0 : index
      %22 = vector.load %arg4[%c0_14, %c0_15] : memref<16x128xbf16, #tpu.memory_space<vmem>>, vector<16x128xbf16>
      tpu.vector_store %arg4[%c0_14, %c0_15], %21 {strides = array<i32>} : memref<16x128xbf16, #tpu.memory_space<vmem>>, vector<16x128xbf16>,
    } else {
    }
    return
  }
  func.func @transform_0(%arg0: i32, %arg1: i32) -> (i32, i32) {
    %c0_i32 = arith.constant 0 : i32
    return %arg0, %arg1 : i32, i32
  }
  func.func @transform_1(%arg0: i32, %arg1: i32) -> (i32, i32) {
    %c0_i32 = arith.constant 0 : i32
    %c0_i32_0 = arith.constant 0 : i32
    return %arg1, %c0_i32 : i32, i32
  }
  func.func @transform_2(%arg0: i32, %arg1: i32) -> (i32, i32) {
    %c0_i32 = arith.constant 0 : i32
    %c0_i32_0 = arith.constant 0 : i32
    return %arg0, %c0_i32 : i32, i32
  }
}

</mosaic_0001>

<llo_original>
// kernel: tpu_custom_call.1
$region0: #{tpu_custom_call.1}
  #allocation0 [shape = 'u32[]', space=smem, size = 0x4, offset = 0x4, fixed_abs, tag = 'smem constant byte address 0x4 - core index']
  #allocation1 [shape = 'u32[72,128]{1,0:T(1,128)}', space=vmem, size = 0x9000, scoped, tag = 'internal scratch']
  #allocation2 [shape = 'f32[16,128]{1,0:T(8,128)}', space=vmem, size = 0x2000, scoped, tag = 'scratch operand']
  %s0 = inlined_call_operand.hbm [shape: bf16[16,1024], index: 0, kind: input, shape index: {}]
  %s1 = inlined_call_operand.hbm [shape: bf16[1024,128], index: 1, kind: input, shape index: {}]
  %s2 = inlined_call_operand.hbm [shape: bf16[16,128], index: 2, kind: output, shape index: {}]
  %s3 = sld [smem:[#allocation0]]
  $region34: #{tpu_custom_call.1} parent=0
    _
  %s5 = ssub.s32 1, %s3
  %s6 = scalar_select 0, %s5, %s3
  $region1: #{tpu_custom_call.1} parent=0
    #allocation3 [shape = 'u8[32768]{0}', space=vmem, size = 0x8000, scoped, tag = 'input window, operand 0, single buffered']
    #allocation4 [shape = 's32[1]{0}', space=sflag, size = 0x4, scoped, tag = 'scoped memory for tpu_custom_call.1']
    #allocation5 [shape = 's32[1]{0}', space=sflag, size = 0x4, scoped, tag = 'scoped memory for tpu_custom_call.1']
    #allocation6 [shape = 'u8[262144]{0}', space=vmem, size = 0x40000, scoped, tag = 'input window, operand 1, single buffered']
    #allocation7 [shape = 's32[1]{0}', space=sflag, size = 0x4, scoped, tag = 'scoped memory for tpu_custom_call.1']
    #allocation8 [shape = 'u8[4096]{0}', space=vmem, size = 0x1000, scoped, tag = 'output window, operand 0, single buffered']
    %7 = vsyncpa [#allocation4], 0
    %8 = vsyncpa [#allocation7], 0
    %9 = vsyncpa [#allocation5], 0
    // Predicated region
    $region2: #{tpu_custom_call.1} parent=1 // pred_check
      _
    $region3: #{tpu_custom_call.1} parent=1 // pred_check_branch
      %11 = sbr.rel (0) target = $region5
    $region4: #{tpu_custom_call.1} parent=1 // pred_region
      %13 = vsyncadd [#allocation4], 0
      %s14 = sshll.u32 %s0, 4
      %s15 = int_to_ptr.hbm [resolvable:$true] %s14
      %s16 = sshll.u32 [#allocation3], 4
      %s17 = int_to_ptr.vmem [resolvable:$true] %s16
      %22 = dma.hbm_to_vmem [thread:$0]  %s15, 1024, %s17, [#allocation4], 512, 512, 32
    $region5: #{tpu_custom_call.1} parent=1 // pred_fallthru
      _
    // Predicated region
    $region6: #{tpu_custom_call.1} parent=1 // pred_check
      _
    $region7: #{tpu_custom_call.1} parent=1 // pred_check_branch
      %24 = sbr.rel (0) target = $region9
    $region8: #{tpu_custom_call.1} parent=1 // pred_region
      %26 = vsyncadd [#allocation7], 0
      %s27 = sshll.u32 %s1, 4
      %s28 = int_to_ptr.hbm [resolvable:$true] %s27
      %s29 = sshll.u32 [#allocation6], 4
      %s30 = int_to_ptr.vmem [resolvable:$true] %s29
      %35 = dma.hbm_to_vmem [thread:$0]  %s28, 8192, %s30, [#allocation7], 64, 64, 4
    $region9: #{tpu_custom_call.1} parent=1 // pred_fallthru
      _
    // Predicated region
    $region10: #{tpu_custom_call.1} parent=1 // pred_check
      _
    $region11: #{tpu_custom_call.1} parent=1 // pred_check_branch
      %37 = sbr.rel (0) target = $region13
    $region12: #{tpu_custom_call.1} parent=1 // pred_region
      %39 = dma.done [#allocation4], 1024
    $region13: #{tpu_custom_call.1} parent=1 // pred_fallthru
      _
    // Predicated region
    $region14: #{tpu_custom_call.1} parent=1 // pred_check
      _
    $region15: #{tpu_custom_call.1} parent=1 // pred_check_branch
      %41 = sbr.rel (0) target = $region17
    $region16: #{tpu_custom_call.1} parent=1 // pred_region
      %43 = dma.done [#allocation7], 8192
    $region17: #{tpu_custom_call.1} parent=1 // pred_fallthru
      _
    %p44 = scmp.eq.s32.totalorder 0, 0
    // Predicated region
    $region18: #{tpu_custom_call.1} parent=1 // pred_check
      %p45 = pneg %p44
    $region19: #{tpu_custom_call.1} parent=1 // pred_check_branch
      %47 = sbr.rel (%p45) target = $region21
    $region20: #{tpu_custom_call.1} parent=1 // pred_region
      %48 = vst [vmem:[#allocation2] sm:$0xff] 0.0
      %49 = vst [vmem:[#allocation2 + $0x8] sm:$0xff] 0.0
    $region21: #{tpu_custom_call.1} parent=1 // pred_fallthru
      _
    %v50 = vld [vmem:[#allocation2] sm:$0xff]
    %v51 = vld [vmem:[#allocation2 + $0x8] sm:$0xff]
    %v52 = vld [vmem:[#allocation3] sm:$0xff]
    %v53 = vld [vmem:[#allocation3 + $0x8] sm:$0xff]
    %v54 = vld [vmem:[#allocation3 + $0x10] sm:$0xff]
    %v55 = vld [vmem:[#allocation3 + $0x18] sm:$0xff]
    %v56 = vld [vmem:[#allocation3 + $0x20] sm:$0xff]
    %v57 = vld [vmem:[#allocation3 + $0x28] sm:$0xff]
    %v58 = vld [vmem:[#allocation3 + $0x30] sm:$0xff]
    %v59 = vld [vmem:[#allocation3 + $0x38] sm:$0xff]
    %v60 = vld [vmem:[#allocation6] sm:$0xf]
    %v61 = vld [vmem:[#allocation6 + $0x4] sm:$0xf]
    %v62 = vld [vmem:[#allocation6 + $0x8] sm:$0xf]
    %v63 = vld [vmem:[#allocation6 + $0xc] sm:$0xf]
    %v64 = vld [vmem:[#allocation6 + $0x10] sm:$0xf]
    %v65 = vld [vmem:[#allocation6 + $0x14] sm:$0xf]
    %v66 = vld [vmem:[#allocation6 + $0x18] sm:$0xf]
    %v67 = vld [vmem:[#allocation6 + $0x1c] sm:$0xf]
    %v68 = vld [vmem:[#allocation6 + $0x20] sm:$0xf]
    %v69 = vld [vmem:[#allocation6 + $0x24] sm:$0xf]
    %v70 = vld [vmem:[#allocation6 + $0x28] sm:$0xf]
    %v71 = vld [vmem:[#allocation6 + $0x2c] sm:$0xf]
    %v72 = vld [vmem:[#allocation6 + $0x30] sm:$0xf]
    %v73 = vld [vmem:[#allocation6 + $0x34] sm:$0xf]
    %v74 = vld [vmem:[#allocation6 + $0x38] sm:$0xf]
    %v75 = vld [vmem:[#allocation6 + $0x3c] sm:$0xf]
    %v76 = vld [vmem:[#allocation6 + $0x40] sm:$0xf]
    %v77 = vld [vmem:[#allocation6 + $0x44] sm:$0xf]
    %v78 = vld [vmem:[#allocation6 + $0x48] sm:$0xf]
    %v79 = vld [vmem:[#allocation6 + $0x4c] sm:$0xf]
    %v80 = vld [vmem:[#allocation6 + $0x50] sm:$0xf]
    %v81 = vld [vmem:[#allocation6 + $0x54] sm:$0xf]
    %v82 = vld [vmem:[#allocation6 + $0x58] sm:$0xf]
    %v83 = vld [vmem:[#allocation6 + $0x5c] sm:$0xf]
    %v84 = vld [vmem:[#allocation6 + $0x60] sm:$0xf]
    %v85 = vld [vmem:[#allocation6 + $0x64] sm:$0xf]
    %v86 = vld [vmem:[#allocation6 + $0x68] sm:$0xf]
    %v87 = vld [vmem:[#allocation6 + $0x6c] sm:$0xf]
    %v88 = vld [vmem:[#allocation6 + $0x70] sm:$0xf]
    %v89 = vld [vmem:[#allocation6 + $0x74] sm:$0xf]
    %v90 = vld [vmem:[#allocation6 + $0x78] sm:$0xf]
    %v91 = vld [vmem:[#allocation6 + $0x7c] sm:$0xf]
    %v92 = vld [vmem:[#allocation6 + $0x80] sm:$0xf]
    %v93 = vld [vmem:[#allocation6 + $0x84] sm:$0xf]
    %v94 = vld [vmem:[#allocation6 + $0x88] sm:$0xf]
    %v95 = vld [vmem:[#allocation6 + $0x8c] sm:$0xf]
    %v96 = vld [vmem:[#allocation6 + $0x90] sm:$0xf]
    %v97 = vld [vmem:[#allocation6 + $0x94] sm:$0xf]
    %v98 = vld [vmem:[#allocation6 + $0x98] sm:$0xf]
    %v99 = vld [vmem:[#allocation6 + $0x9c] sm:$0xf]
    %v100 = vld [vmem:[#allocation6 + $0xa0] sm:$0xf]
    %v101 = vld [vmem:[#allocation6 + $0xa4] sm:$0xf]
    %v102 = vld [vmem:[#allocation6 + $0xa8] sm:$0xf]
    %v103 = vld [vmem:[#allocation6 + $0xac] sm:$0xf]
    %v104 = vld [vmem:[#allocation6 + $0xb0] sm:$0xf]
    %v105 = vld [vmem:[#allocation6 + $0xb4] sm:$0xf]
    %v106 = vld [vmem:[#allocation6 + $0xb8] sm:$0xf]
    %v107 = vld [vmem:[#allocation6 + $0xbc] sm:$0xf]
    %v108 = vld [vmem:[#allocation6 + $0xc0] sm:$0xf]
    %v109 = vld [vmem:[#allocation6 + $0xc4] sm:$0xf]
    %v110 = vld [vmem:[#allocation6 + $0xc8] sm:$0xf]
    %v111 = vld [vmem:[#allocation6 + $0xcc] sm:$0xf]
    %v112 = vld [vmem:[#allocation6 + $0xd0] sm:$0xf]
    %v113 = vld [vmem:[#allocation6 + $0xd4] sm:$0xf]
    %v114 = vld [vmem:[#allocation6 + $0xd8] sm:$0xf]
    %v115 = vld [vmem:[#allocation6 + $0xdc] sm:$0xf]
    %v116 = vld [vmem:[#allocation6 + $0xe0] sm:$0xf]
    %v117 = vld [vmem:[#allocation6 + $0xe4] sm:$0xf]
    %v118 = vld [vmem:[#allocation6 + $0xe8] sm:$0xf]
    %v119 = vld [vmem:[#allocation6 + $0xec] sm:$0xf]
    %v120 = vld [vmem:[#allocation6 + $0xf0] sm:$0xf]
    %v121 = vld [vmem:[#allocation6 + $0xf4] sm:$0xf]
    %v122 = vld [vmem:[#allocation6 + $0xf8] sm:$0xf]
    %v123 = vld [vmem:[#allocation6 + $0xfc] sm:$0xf]
    %v124 = vld [vmem:[#allocation6 + $0x100] sm:$0xf]
    %v125 = vld [vmem:[#allocation6 + $0x104] sm:$0xf]
    %v126 = vld [vmem:[#allocation6 + $0x108] sm:$0xf]
    %v127 = vld [vmem:[#allocation6 + $0x10c] sm:$0xf]
    %v128 = vld [vmem:[#allocation6 + $0x110] sm:$0xf]
    %v129 = vld [vmem:[#allocation6 + $0x114] sm:$0xf]
    %v130 = vld [vmem:[#allocation6 + $0x118] sm:$0xf]
    %v131 = vld [vmem:[#allocation6 + $0x11c] sm:$0xf]
    %v132 = vld [vmem:[#allocation6 + $0x120] sm:$0xf]
    %v133 = vld [vmem:[#allocation6 + $0x124] sm:$0xf]
    %v134 = vld [vmem:[#allocation6 + $0x128] sm:$0xf]
    %v135 = vld [vmem:[#allocation6 + $0x12c] sm:$0xf]
    %v136 = vld [vmem:[#allocation6 + $0x130] sm:$0xf]
    %v137 = vld [vmem:[#allocation6 + $0x134] sm:$0xf]
    %v138 = vld [vmem:[#allocation6 + $0x138] sm:$0xf]
    %v139 = vld [vmem:[#allocation6 + $0x13c] sm:$0xf]
    %v140 = vld [vmem:[#allocation6 + $0x140] sm:$0xf]
    %v141 = vld [vmem:[#allocation6 + $0x144] sm:$0xf]
    %v142 = vld [vmem:[#allocation6 + $0x148] sm:$0xf]
    %v143 = vld [vmem:[#allocation6 + $0x14c] sm:$0xf]
    %v144 = vld [vmem:[#allocation6 + $0x150] sm:$0xf]
    %v145 = vld [vmem:[#allocation6 + $0x154] sm:$0xf]
    %v146 = vld [vmem:[#allocation6 + $0x158] sm:$0xf]
    %v147 = vld [vmem:[#allocation6 + $0x15c] sm:$0xf]
    %v148 = vld [vmem:[#allocation6 + $0x160] sm:$0xf]
    %v149 = vld [vmem:[#allocation6 + $0x164] sm:$0xf]
    %v150 = vld [vmem:[#allocation6 + $0x168] sm:$0xf]
    %v151 = vld [vmem:[#allocation6 + $0x16c] sm:$0xf]
    %v152 = vld [vmem:[#allocation6 + $0x170] sm:$0xf]
    %v153 = vld [vmem:[#allocation6 + $0x174] sm:$0xf]
    %v154 = vld [vmem:[#allocation6 + $0x178] sm:$0xf]
    %v155 = vld [vmem:[#allocation6 + $0x17c] sm:$0xf]
    %v156 = vld [vmem:[#allocation6 + $0x180] sm:$0xf]
    %v157 = vld [vmem:[#allocation6 + $0x184] sm:$0xf]
    %v158 = vld [vmem:[#allocation6 + $0x188] sm:$0xf]
    %v159 = vld [vmem:[#allocation6 + $0x18c] sm:$0xf]
    %v160 = vld [vmem:[#allocation6 + $0x190] sm:$0xf]
    %v161 = vld [vmem:[#allocation6 + $0x194] sm:$0xf]
    %v162 = vld [vmem:[#allocation6 + $0x198] sm:$0xf]
    %v163 = vld [vmem:[#allocation6 + $0x19c] sm:$0xf]
    %v164 = vld [vmem:[#allocation6 + $0x1a0] sm:$0xf]
    %v165 = vld [vmem:[#allocation6 + $0x1a4] sm:$0xf]
    %v166 = vld [vmem:[#allocation6 + $0x1a8] sm:$0xf]
    %v167 = vld [vmem:[#allocation6 + $0x1ac] sm:$0xf]
    %v168 = vld [vmem:[#allocation6 + $0x1b0] sm:$0xf]
    %v169 = vld [vmem:[#allocation6 + $0x1b4] sm:$0xf]
    %v170 = vld [vmem:[#allocation6 + $0x1b8] sm:$0xf]
    %v171 = vld [vmem:[#allocation6 + $0x1bc] sm:$0xf]
    %v172 = vld [vmem:[#allocation6 + $0x1c0] sm:$0xf]
    %v173 = vld [vmem:[#allocation6 + $0x1c4] sm:$0xf]
    %v174 = vld [vmem:[#allocation6 + $0x1c8] sm:$0xf]
    %v175 = vld [vmem:[#allocation6 + $0x1cc] sm:$0xf]
    %v176 = vld [vmem:[#allocation6 + $0x1d0] sm:$0xf]
    %v177 = vld [vmem:[#allocation6 + $0x1d4] sm:$0xf]
    %v178 = vld [vmem:[#allocation6 + $0x1d8] sm:$0xf]
    %v179 = vld [vmem:[#allocation6 + $0x1dc] sm:$0xf]
    %v180 = vld [vmem:[#allocation6 + $0x1e0] sm:$0xf]
    %v181 = vld [vmem:[#allocation6 + $0x1e4] sm:$0xf]
    %v182 = vld [vmem:[#allocation6 + $0x1e8] sm:$0xf]
    %v183 = vld [vmem:[#allocation6 + $0x1ec] sm:$0xf]
    %v184 = vld [vmem:[#allocation6 + $0x1f0] sm:$0xf]
    %v185 = vld [vmem:[#allocation6 + $0x1f4] sm:$0xf]
    %v186 = vld [vmem:[#allocation6 + $0x1f8] sm:$0xf]
    %v187 = vld [vmem:[#allocation6 + $0x1fc] sm:$0xf]
    %v196 = vunpack.c.l.b16 %v52
    %v197 = vunpack.c.h.b16 %v52
    %v198 = vunpack.c.l.b16 %v53
    %v199 = vunpack.c.h.b16 %v53
    %v200 = vunpack.c.l.b16 %v54
    %v201 = vunpack.c.h.b16 %v54
    %v202 = vunpack.c.l.b16 %v55
    %v203 = vunpack.c.h.b16 %v55
    %v204 = vunpack.c.l.b16 %v56
    %v205 = vunpack.c.h.b16 %v56
    %v206 = vunpack.c.l.b16 %v57
    %v207 = vunpack.c.h.b16 %v57
    %v208 = vunpack.c.l.b16 %v58
    %v209 = vunpack.c.h.b16 %v58
    %v210 = vunpack.c.l.b16 %v59
    %v211 = vunpack.c.h.b16 %v59
    %v212 = vpack.c.b16 %v204, %v196
    %v213 = vpack.c.b16 %v205, %v197
    %v214 = vpack.c.b16 %v206, %v198
    %v215 = vpack.c.b16 %v207, %v199
    %v216 = vpack.c.b16 %v208, %v200
    %v217 = vpack.c.b16 %v209, %v201
    %v218 = vpack.c.b16 %v210, %v202
    %v219 = vpack.c.b16 %v211, %v203
    %v356 = vunpack.c.l.b16 %v60
    %v357 = vunpack.c.l.b16 %v61
    %v358 = vunpack.c.l.b16 %v62
    %v359 = vunpack.c.l.b16 %v63
    %v360 = vunpack.c.l.b16 %v64
    %v361 = vunpack.c.l.b16 %v65
    %v362 = vunpack.c.l.b16 %v66
    %v363 = vunpack.c.l.b16 %v67
    %v364 = vunpack.c.l.b16 %v68
    %v365 = vunpack.c.l.b16 %v69
    %v366 = vunpack.c.l.b16 %v70
    %v367 = vunpack.c.l.b16 %v71
    %v368 = vunpack.c.l.b16 %v72
    %v369 = vunpack.c.l.b16 %v73
    %v370 = vunpack.c.l.b16 %v74
    %v371 = vunpack.c.l.b16 %v75
    %v372 = vunpack.c.l.b16 %v76
    %v373 = vunpack.c.l.b16 %v77
    %v374 = vunpack.c.l.b16 %v78
    %v375 = vunpack.c.l.b16 %v79
    %v376 = vunpack.c.l.b16 %v80
    %v377 = vunpack.c.l.b16 %v81
    %v378 = vunpack.c.l.b16 %v82
    %v379 = vunpack.c.l.b16 %v83
    %v380 = vunpack.c.l.b16 %v84
    %v381 = vunpack.c.l.b16 %v85
    %v382 = vunpack.c.l.b16 %v86
    %v383 = vunpack.c.l.b16 %v87
    %v384 = vunpack.c.l.b16 %v88
    %v385 = vunpack.c.l.b16 %v89
    %v386 = vunpack.c.l.b16 %v90
    %v387 = vunpack.c.l.b16 %v91
    %v388 = vunpack.c.l.b16 %v92
    %v389 = vunpack.c.l.b16 %v93
    %v390 = vunpack.c.l.b16 %v94
    %v391 = vunpack.c.l.b16 %v95
    %v392 = vunpack.c.l.b16 %v96
    %v393 = vunpack.c.l.b16 %v97
    %v394 = vunpack.c.l.b16 %v98
    %v395 = vunpack.c.l.b16 %v99
    %v396 = vunpack.c.l.b16 %v100
    %v397 = vunpack.c.l.b16 %v101
    %v398 = vunpack.c.l.b16 %v102
    %v399 = vunpack.c.l.b16 %v103
    %v400 = vunpack.c.l.b16 %v104
    %v401 = vunpack.c.l.b16 %v105
    %v402 = vunpack.c.l.b16 %v106
    %v403 = vunpack.c.l.b16 %v107
    %v404 = vunpack.c.l.b16 %v108
    %v405 = vunpack.c.l.b16 %v109
    %v406 = vunpack.c.l.b16 %v110
    %v407 = vunpack.c.l.b16 %v111
    %v408 = vunpack.c.l.b16 %v112
    %v409 = vunpack.c.l.b16 %v113
    %v410 = vunpack.c.l.b16 %v114
    %v411 = vunpack.c.l.b16 %v115
    %v412 = vunpack.c.l.b16 %v116
    %v413 = vunpack.c.l.b16 %v117
    %v414 = vunpack.c.l.b16 %v118
    %v415 = vunpack.c.l.b16 %v119
    %v416 = vunpack.c.l.b16 %v120
    %v417 = vunpack.c.l.b16 %v121
    %v418 = vunpack.c.l.b16 %v122
    %v419 = vunpack.c.l.b16 %v123
    %v420 = vunpack.c.l.b16 %v124
    %v421 = vunpack.c.l.b16 %v125
    %v422 = vunpack.c.l.b16 %v126
    %v423 = vunpack.c.l.b16 %v127
    %v424 = vunpack.c.l.b16 %v128
    %v425 = vunpack.c.l.b16 %v129
    %v426 = vunpack.c.l.b16 %v130
    %v427 = vunpack.c.l.b16 %v131
    %v428 = vunpack.c.l.b16 %v132
    %v429 = vunpack.c.l.b16 %v133
    %v430 = vunpack.c.l.b16 %v134
    %v431 = vunpack.c.l.b16 %v135
    %v432 = vunpack.c.l.b16 %v136
    %v433 = vunpack.c.l.b16 %v137
    %v434 = vunpack.c.l.b16 %v138
    %v435 = vunpack.c.l.b16 %v139
    %v436 = vunpack.c.l.b16 %v140
    %v437 = vunpack.c.l.b16 %v141
    %v438 = vunpack.c.l.b16 %v142
    %v439 = vunpack.c.l.b16 %v143
    %v440 = vunpack.c.l.b16 %v144
    %v441 = vunpack.c.l.b16 %v145
    %v442 = vunpack.c.l.b16 %v146
    %v443 = vunpack.c.l.b16 %v147
    %v444 = vunpack.c.l.b16 %v148
    %v445 = vunpack.c.l.b16 %v149
    %v446 = vunpack.c.l.b16 %v150
    %v447 = vunpack.c.l.b16 %v151
    %v448 = vunpack.c.l.b16 %v152
    %v449 = vunpack.c.l.b16 %v153
    %v450 = vunpack.c.l.b16 %v154
    %v451 = vunpack.c.l.b16 %v155
    %v452 = vunpack.c.l.b16 %v156
    %v453 = vunpack.c.l.b16 %v157
    %v454 = vunpack.c.l.b16 %v158
    %v455 = vunpack.c.l.b16 %v159
    %v456 = vunpack.c.l.b16 %v160
    %v457 = vunpack.c.l.b16 %v161
    %v458 = vunpack.c.l.b16 %v162
    %v459 = vunpack.c.l.b16 %v163
    %v460 = vunpack.c.l.b16 %v164
    %v461 = vunpack.c.l.b16 %v165
    %v462 = vunpack.c.l.b16 %v166
    %v463 = vunpack.c.l.b16 %v167
    %v464 = vunpack.c.l.b16 %v168
    %v465 = vunpack.c.l.b16 %v169
    %v466 = vunpack.c.l.b16 %v170
    %v467 = vunpack.c.l.b16 %v171
    %v468 = vunpack.c.l.b16 %v172
    %v469 = vunpack.c.l.b16 %v173
    %v470 = vunpack.c.l.b16 %v174
    %v471 = vunpack.c.l.b16 %v175
    %v472 = vunpack.c.l.b16 %v176
    %v473 = vunpack.c.l.b16 %v177
    %v474 = vunpack.c.l.b16 %v178
    %v475 = vunpack.c.l.b16 %v179
    %v476 = vunpack.c.l.b16 %v180
    %v477 = vunpack.c.l.b16 %v181
    %v478 = vunpack.c.l.b16 %v182
    %v479 = vunpack.c.l.b16 %v183
    %v480 = vunpack.c.l.b16 %v184
    %v481 = vunpack.c.l.b16 %v185
    %v482 = vunpack.c.l.b16 %v186
    %v483 = vunpack.c.l.b16 %v187
    %v484 = vpack.c.b16 %v357, %v356
    %v485 = vpack.c.b16 %v359, %v358
    %v486 = vpack.c.b16 %v361, %v360
    %v487 = vpack.c.b16 %v363, %v362
    %v488 = vpack.c.b16 %v365, %v364
    %v489 = vpack.c.b16 %v367, %v366
    %v490 = vpack.c.b16 %v369, %v368
    %v491 = vpack.c.b16 %v371, %v370
    %v492 = vpack.c.b16 %v373, %v372
    %v493 = vpack.c.b16 %v375, %v374
    %v494 = vpack.c.b16 %v377, %v376
    %v495 = vpack.c.b16 %v379, %v378
    %v496 = vpack.c.b16 %v381, %v380
    %v497 = vpack.c.b16 %v383, %v382
    %v498 = vpack.c.b16 %v385, %v384
    %v499 = vpack.c.b16 %v387, %v386
    %v500 = vpack.c.b16 %v389, %v388
    %v501 = vpack.c.b16 %v391, %v390
    %v502 = vpack.c.b16 %v393, %v392
    %v503 = vpack.c.b16 %v395, %v394
    %v504 = vpack.c.b16 %v397, %v396
    %v505 = vpack.c.b16 %v399, %v398
    %v506 = vpack.c.b16 %v401, %v400
    %v507 = vpack.c.b16 %v403, %v402
    %v508 = vpack.c.b16 %v405, %v404
    %v509 = vpack.c.b16 %v407, %v406
    %v510 = vpack.c.b16 %v409, %v408
    %v511 = vpack.c.b16 %v411, %v410
    %v512 = vpack.c.b16 %v413, %v412
    %v513 = vpack.c.b16 %v415, %v414
    %v514 = vpack.c.b16 %v417, %v416
    %v515 = vpack.c.b16 %v419, %v418
    %v516 = vpack.c.b16 %v421, %v420
    %v517 = vpack.c.b16 %v423, %v422
    %v518 = vpack.c.b16 %v425, %v424
    %v519 = vpack.c.b16 %v427, %v426
    %v520 = vpack.c.b16 %v429, %v428
    %v521 = vpack.c.b16 %v431, %v430
    %v522 = vpack.c.b16 %v433, %v432
    %v523 = vpack.c.b16 %v435, %v434
    %v524 = vpack.c.b16 %v437, %v436
    %v525 = vpack.c.b16 %v439, %v438
    %v526 = vpack.c.b16 %v441, %v440
    %v527 = vpack.c.b16 %v443, %v442
    %v528 = vpack.c.b16 %v445, %v444
    %v529 = vpack.c.b16 %v447, %v446
    %v530 = vpack.c.b16 %v449, %v448
    %v531 = vpack.c.b16 %v451, %v450
    %v532 = vpack.c.b16 %v453, %v452
    %v533 = vpack.c.b16 %v455, %v454
    %v534 = vpack.c.b16 %v457, %v456
    %v535 = vpack.c.b16 %v459, %v458
    %v536 = vpack.c.b16 %v461, %v460
    %v537 = vpack.c.b16 %v463, %v462
    %v538 = vpack.c.b16 %v465, %v464
    %v539 = vpack.c.b16 %v467, %v466
    %v540 = vpack.c.b16 %v469, %v468
    %v541 = vpack.c.b16 %v471, %v470
    %v542 = vpack.c.b16 %v473, %v472
    %v543 = vpack.c.b16 %v475, %v474
    %v544 = vpack.c.b16 %v477, %v476
    %v545 = vpack.c.b16 %v479, %v478
    %v546 = vpack.c.b16 %v481, %v480
    %v547 = vpack.c.b16 %v483, %v482
    %612 = vmatpush.bf16.msra.mxu0 %v491
    %613 = vmatpush.bf16.msra.mxu0 %v490
    %614 = vmatpush.bf16.msra.mxu0 %v489
    %615 = vmatpush.bf16.msra.mxu0 %v488
    %616 = vmatpush.bf16.msra.mxu0 %v487
    %617 = vmatpush.bf16.msra.mxu0 %v486
    %618 = vmatpush.bf16.msra.mxu0 %v485
    %619 = vmatpush.bf16.msra.mxu0 %v484
    %620 = vmatmul.bf16.gmra.mxu0 %v212
    %v621 = vpop.f32.mrf.mxu0
    %v622 = vadd.f32 0.0, %v621
    %v623 = vpop.f32.mrf.mxu0
    %v624 = vadd.f32 0.0, %v623
    %625 = vdwg.mxu0
    %626 = vmatpush.bf16.msra.mxu0 %v499
    %627 = vmatpush.bf16.msra.mxu0 %v498
    %628 = vmatpush.bf16.msra.mxu0 %v497
    %629 = vmatpush.bf16.msra.mxu0 %v496
    %630 = vmatpush.bf16.msra.mxu0 %v495
    %631 = vmatpush.bf16.msra.mxu0 %v494
    %632 = vmatpush.bf16.msra.mxu0 %v493
    %633 = vmatpush.bf16.msra.mxu0 %v492
    %634 = vmatmul.bf16.gmra.mxu0 %v213
    %v635 = vpop.f32.mrf.mxu0
    %v636 = vadd.f32 %v622, %v635
    %v637 = vpop.f32.mrf.mxu0
    %v638 = vadd.f32 %v624, %v637
    %639 = vdwg.mxu0
    %640 = vmatpush.bf16.msra.mxu0 %v507
    %641 = vmatpush.bf16.msra.mxu0 %v506
    %642 = vmatpush.bf16.msra.mxu0 %v505
    %643 = vmatpush.bf16.msra.mxu0 %v504
    %644 = vmatpush.bf16.msra.mxu0 %v503
    %645 = vmatpush.bf16.msra.mxu0 %v502
    %646 = vmatpush.bf16.msra.mxu0 %v501
    %647 = vmatpush.bf16.msra.mxu0 %v500
    %648 = vmatmul.bf16.gmra.mxu0 %v214
    %v649 = vpop.f32.mrf.mxu0
    %v650 = vadd.f32 %v636, %v649
    %v651 = vpop.f32.mrf.mxu0
    %v652 = vadd.f32 %v638, %v651
    %653 = vdwg.mxu0
    %654 = vmatpush.bf16.msra.mxu0 %v515
    %655 = vmatpush.bf16.msra.mxu0 %v514
    %656 = vmatpush.bf16.msra.mxu0 %v513
    %657 = vmatpush.bf16.msra.mxu0 %v512
    %658 = vmatpush.bf16.msra.mxu0 %v511
    %659 = vmatpush.bf16.msra.mxu0 %v510
    %660 = vmatpush.bf16.msra.mxu0 %v509
    %661 = vmatpush.bf16.msra.mxu0 %v508
    %662 = vmatmul.bf16.gmra.mxu0 %v215
    %v663 = vpop.f32.mrf.mxu0
    %v664 = vadd.f32 %v650, %v663
    %v665 = vpop.f32.mrf.mxu0
    %v666 = vadd.f32 %v652, %v665
    %667 = vdwg.mxu0
    %668 = vmatpush.bf16.msra.mxu0 %v523
    %669 = vmatpush.bf16.msra.mxu0 %v522
    %670 = vmatpush.bf16.msra.mxu0 %v521
    %671 = vmatpush.bf16.msra.mxu0 %v520
    %672 = vmatpush.bf16.msra.mxu0 %v519
    %673 = vmatpush.bf16.msra.mxu0 %v518
    %674 = vmatpush.bf16.msra.mxu0 %v517
    %675 = vmatpush.bf16.msra.mxu0 %v516
    %676 = vmatmul.bf16.gmra.mxu0 %v216
    %v677 = vpop.f32.mrf.mxu0
    %v678 = vadd.f32 %v664, %v677
    %v679 = vpop.f32.mrf.mxu0
    %v680 = vadd.f32 %v666, %v679
    %681 = vdwg.mxu0
    %682 = vmatpush.bf16.msra.mxu0 %v531
    %683 = vmatpush.bf16.msra.mxu0 %v530
    %684 = vmatpush.bf16.msra.mxu0 %v529
    %685 = vmatpush.bf16.msra.mxu0 %v528
    %686 = vmatpush.bf16.msra.mxu0 %v527
    %687 = vmatpush.bf16.msra.mxu0 %v526
    %688 = vmatpush.bf16.msra.mxu0 %v525
    %689 = vmatpush.bf16.msra.mxu0 %v524
    %690 = vmatmul.bf16.gmra.mxu0 %v217
    %v691 = vpop.f32.mrf.mxu0
    %v692 = vadd.f32 %v678, %v691
    %v693 = vpop.f32.mrf.mxu0
    %v694 = vadd.f32 %v680, %v693
    %695 = vdwg.mxu0
    %696 = vmatpush.bf16.msra.mxu0 %v539
    %697 = vmatpush.bf16.msra.mxu0 %v538
    %698 = vmatpush.bf16.msra.mxu0 %v537
    %699 = vmatpush.bf16.msra.mxu0 %v536
    %700 = vmatpush.bf16.msra.mxu0 %v535
    %701 = vmatpush.bf16.msra.mxu0 %v534
    %702 = vmatpush.bf16.msra.mxu0 %v533
    %703 = vmatpush.bf16.msra.mxu0 %v532
    %704 = vmatmul.bf16.gmra.mxu0 %v218
    %v705 = vpop.f32.mrf.mxu0
    %v706 = vadd.f32 %v692, %v705
    %v707 = vpop.f32.mrf.mxu0
    %v708 = vadd.f32 %v694, %v707
    %709 = vdwg.mxu0
    %710 = vmatpush.bf16.msra.mxu0 %v547
    %711 = vmatpush.bf16.msra.mxu0 %v546
    %712 = vmatpush.bf16.msra.mxu0 %v545
    %713 = vmatpush.bf16.msra.mxu0 %v544
    %714 = vmatpush.bf16.msra.mxu0 %v543
    %715 = vmatpush.bf16.msra.mxu0 %v542
    %716 = vmatpush.bf16.msra.mxu0 %v541
    %717 = vmatpush.bf16.msra.mxu0 %v540
    %718 = vmatmul.bf16.gmra.mxu0 %v219
    %v719 = vpop.f32.mrf.mxu0
    %v720 = vadd.f32 %v706, %v719
    %v721 = vpop.f32.mrf.mxu0
    %v722 = vadd.f32 %v708, %v721
    %723 = vdwg.mxu0
    %v724 = vadd.f32 %v50, %v720
    %v725 = vadd.f32 %v51, %v722
    %726 = vst [vmem:[#allocation2] sm:$0xff] %v724
    %727 = vst [vmem:[#allocation2 + $0x8] sm:$0xff] %v725
    // Predicated region
    $region22: #{tpu_custom_call.1} parent=1 // pred_check
      %p728 = pneg %p44
    $region23: #{tpu_custom_call.1} parent=1 // pred_check_branch
      %730 = sbr.rel (%p728) target = $region25
    $region24: #{tpu_custom_call.1} parent=1 // pred_region
      %v731 = vld [vmem:[#allocation2] sm:$0xff]
      %v732 = vld [vmem:[#allocation2 + $0x8] sm:$0xff]
      %v733 = vmul.f32 %v731, %v731
      %v734 = vmul.f32 %v732, %v732
      %735 = vadd.xlane.f32.xlu0 %v733
      %v736 = vpop.xlane.xlu0 %735
      %737 = vadd.xlane.f32.xlu0 %v734
      %v738 = vpop.xlane.xlu0 %737
      %v739 = vadd.f32 %v736, 1e-12
      %v740 = vadd.f32 %v738, 1e-12
      %v741 = vrsqrt.pop %v739
      %v742 = vmul.f32 %v741, %v739
      %v743 = vmul.f32 %v742, %v741
      %v744 = vmul.f32 0.5, %v743
      %v745 = vsub.f32 1.5, %v744
      %v746 = vmul.f32 %v741, %v745
      %vm747 = vweird.f32 %v739
      %vm748 = vweird.f32 %v741
      %vm749 = vmor %vm747, %vm748
      %v750 = vsel %vm749, %v741, %v746
      %v751 = vrsqrt.pop %v740
      %v752 = vmul.f32 %v751, %v740
      %v753 = vmul.f32 %v752, %v751
      %v754 = vmul.f32 0.5, %v753
      %v755 = vsub.f32 1.5, %v754
      %v756 = vmul.f32 %v751, %v755
      %vm757 = vweird.f32 %v740
      %vm758 = vweird.f32 %v751
      %vm759 = vmor %vm757, %vm758
      %v760 = vsel %vm759, %v751, %v756
      %v761 = vmul.f32 %v731, %v750
      %v762 = vmul.f32 %v732, %v760
      %v763 = vpack.c.bf16 %v761, %v761
      %v764 = vpack.c.bf16 %v762, %v762
      %765 = vst [vmem:[#allocation8] sm:$0xf] %v763
      %766 = vst [vmem:[#allocation8 + $0x4] sm:$0xf] %v764
    $region25: #{tpu_custom_call.1} parent=1 // pred_fallthru
      _
    // Predicated region
    $region26: #{tpu_custom_call.1} parent=1 // pred_check
      _
    $region27: #{tpu_custom_call.1} parent=1 // pred_check_branch
      %768 = sbr.rel (0) target = $region29
    $region28: #{tpu_custom_call.1} parent=1 // pred_region
      %770 = vsyncadd [#allocation5], 0
      %s771 = sshll.u32 [#allocation8], 4
      %s772 = int_to_ptr.vmem [resolvable:$true] %s771
      %s773 = sshll.u32 %s2, 4
      %s774 = int_to_ptr.hbm [resolvable:$true] %s773
      %779 = dma.vmem_to_hbm [thread:$0]  %s772, 128, %s774, [#allocation5], 64, 64, 4
    $region29: #{tpu_custom_call.1} parent=1 // pred_fallthru
      _
    // Predicated region
    $region30: #{tpu_custom_call.1} parent=1 // pred_check
      _
    $region31: #{tpu_custom_call.1} parent=1 // pred_check_branch
      %781 = sbr.rel (0) target = $region33
    $region32: #{tpu_custom_call.1} parent=1 // pred_region
      %783 = dma.done [#allocation5], 128
    $region33: #{tpu_custom_call.1} parent=1 // pred_fallthru
      _
    %784 = vsyncpa [#allocation4], 1
    %785 = vsyncpa [#allocation7], 1
    %786 = vsyncpa [#allocation5], 1

</llo_original>
